<compile_context>
chip_gen: v6e
topology: v6e:2x2x1
jax: 0.10.0
libtpu: 0.0.40
codegen_flags: <defaults>
</compile_context>

<pallas_src>
import functools

import jax
import jax.numpy as jnp
from jax.experimental import pallas as pl
from jax.experimental.pallas import tpu as pltpu

RESCALE = {
    "SE": 1.0 / 1.4142135623730951,
    "L1": 1.0 / 1.1283791670955126,
    "EU": 6.344349953316304,
}


def twin_kernel(x_ref, w_ref, o_ref, *, d_in, scale, metric, matmul_dtype):
    # x_ref: (bm, 2*d_in) packed [x1 | x2]; w_ref: (d_in, d_out); o_ref: (bm, 1)
    x1 = x_ref[:, :d_in]
    x2 = x_ref[:, d_in:]
    dx = x1 - x2                       # Linear bias cancels exactly in xx - yy

    if matmul_dtype is not None:       # optional bf16 MXU path (v6e / v7x)
        dx = dx.astype(matmul_dtype)   # W is already cast once in the wrapper

    # Single MXU matmul, f32 accumulation.
    d = jnp.dot(dx, w_ref[...], preferred_element_type=jnp.float32)

    if metric == "SE":
        r = jnp.sum(d * d, axis=-1, keepdims=True) * (scale * scale)
    elif metric == "L1":
        r = jnp.sum(jnp.abs(d), axis=-1, keepdims=True) * scale
    else:  # "EU"
        r = jnp.sqrt(jnp.sum(d * d, axis=-1, keepdims=True)) * scale

    # TODO(synk): output block has lane width 1 (masked stores); a lane-dense
    # (1, bm) layout needs a sublane->lane relayout -- skipped since the
    # [B]-sized output is negligible HBM traffic next to x.
    o_ref[...] = r


def _round_up(n, m):
    return ((n + m - 1) // m) * m


def _choose_bm(B, d_in_p, target_tile_bytes):
    """Batch tile sized for HBM bandwidth (>= ~4 MiB of x per grid step),
    multiple of 256 (MXU-friendly), used with a cdiv grid so it need NOT
    divide B.  Keeps >= 2 grid steps when B allows it (megacore balance)."""
    bytes_per_row = 2 * d_in_p * 4
    bm = max(1024, target_tile_bytes // bytes_per_row)
    bm = max(256, (bm // 256) * 256)
    if B > 512:
        # keep at least 2 grid steps so both v7x TensorCores get work
        bm = min(bm, _round_up(pl.cdiv(B, 2), 256))
    bm = min(bm, _round_up(B, 8))
    return bm


def twin_forward(x, w, b=None, *, metric="SE", rescale=True,
                 target_tile_bytes=4 << 20, matmul_dtype=None,
                 w_buffer_count=1, x_buffer_count=None,
                 vmem_limit_bytes=None):
    """x: [B, 2, Din] f32; w: [Din, Dout]; b: [Dout] (unused: it cancels).

    Returns [B] f32, matching Twin(Linear(Din, Dout), metric, rescale).
    """
    assert metric in RESCALE
    B, two, d_in = x.shape
    assert two == 2
    d_out = w.shape[1]
    del b  # bias cancels exactly in xx - yy; never loaded on-chip

    scale = RESCALE[metric] if rescale else 1.0
    # TODO(synk): with rescale=False the original PyTorch forward is undefined
    # (xx/yy never assigned); we treat it as scale=1.0.

    # Lane-align the x1/x2 split and fill MXU lanes: pad Din to a multiple of
    # 128 (zero-padded W rows keep the matmul exact).  No-op when Din % 128 == 0.
    d_in_p = _round_up(d_in, 128)
    if d_in_p != d_in:
        # TODO(synk): this pad is one extra HBM pass over x; only taken for
        # feature dims that are not multiples of 128 (e.g. the toy Din=32).
        x = jnp.pad(x, ((0, 0), (0, 0), (0, d_in_p - d_in)))
        w = jnp.pad(w, ((0, d_in_p - d_in), (0, 0)))

    if matmul_dtype is not None:
        w = w.astype(matmul_dtype)      # cast W once in the wrapper, not per tile

    x_packed = x.reshape(B, 2 * d_in_p)  # row-major reshape: free, no HBM copy

    bm = _choose_bm(B, d_in_p, target_tile_bytes)
    grid = (pl.cdiv(B, bm),)             # tail block: reads padded, writes masked

    # Explicit VMEM budget so bigger tiles don't trip the default scoped limit
    # (16 MiB v5e / 32 MiB v6e,v7x); capped at 48 MiB to stay inside v7x's
    # 64 MiB physical VMEM.
    x_bufs = x_buffer_count if x_buffer_count is not None else 2
    w_bufs = w_buffer_count if w_buffer_count is not None else 2
    x_tile_bytes = bm * 2 * d_in_p * 4
    w_tile_bytes = d_in_p * d_out * jnp.dtype(w.dtype).itemsize
    interm_bytes = bm * (d_in_p + d_out) * 4          # dx + matmul result
    needed = (x_bufs * x_tile_bytes + w_bufs * w_tile_bytes
              + interm_bytes + 2 * bm * 4)
    if vmem_limit_bytes is None:
        vmem_limit_bytes = min(48 << 20, max(32 << 20, needed + (2 << 20)))
    # TODO(synk): for very large Dout (W >> ~32 MiB) add an inner "arbitrary"
    # grid axis over d_out chunks with a (bm, 1) accumulator instead of keeping
    # W fully resident.

    x_spec_kwargs = {}
    if x_buffer_count is not None:
        x_spec_kwargs["pipeline_mode"] = pl.Buffered(x_buffer_count)
    w_spec_kwargs = {}
    if w_buffer_count is not None:
        # W's index_map is constant -> single buffer, never re-fetched.
        w_spec_kwargs["pipeline_mode"] = pl.Buffered(w_buffer_count)

    kernel = functools.partial(
        twin_kernel, d_in=d_in_p, scale=scale, metric=metric,
        matmul_dtype=matmul_dtype)

    out = pl.pallas_call(
        kernel,
        out_shape=jax.ShapeDtypeStruct((B, 1), jnp.float32),
        grid_spec=pltpu.PrefetchScalarGridSpec(
            num_scalar_prefetch=0,
            grid=grid,
            in_specs=[
                pl.BlockSpec((bm, 2 * d_in_p), lambda i: (i, 0),
                             **x_spec_kwargs),
                pl.BlockSpec((d_in_p, d_out), lambda i: (0, 0),
                             **w_spec_kwargs),
            ],
            out_specs=pl.BlockSpec((bm, 1), lambda i: (i, 0)),
        ),
        compiler_params=pltpu.CompilerParams(
            dimension_semantics=("parallel",),
            vmem_limit_bytes=vmem_limit_bytes),
    )(x_packed, w)

    return out.reshape(B)


def twin_reference(x, w, b, *, metric="SE", rescale=True):
    """Literal translation of the PyTorch forward (keeps the bias adds)."""
    x1, x2 = x[:, 0, :], x[:, 1, :]
    scale = RESCALE[metric] if rescale else 1.0
    hi = jax.lax.Precision.HIGHEST      # full-f32 reference matmuls
    xx = (jnp.matmul(x1, w, precision=hi) + b) * scale
    yy = (jnp.matmul(x2, w, precision=hi) + b) * scale
    d = xx - yy
    if metric == "SE":
        return jnp.sum(d * d, axis=-1)
    if metric == "L1":
        return jnp.sum(jnp.abs(d), axis=-1)
    return jnp.linalg.norm(d, axis=-1)


def _run(x, w, b, **kw):
    try:
        return jax.block_until_ready(twin_forward(x, w, b, **kw))
    except Exception:
        # TODO(synk): fall back to default (double-buffered) resident W if this
        # jax version rejects pipeline_mode=pl.Buffered(1).
        return jax.block_until_ready(
            twin_forward(x, w, b, w_buffer_count=None, **kw))


if __name__ == "__main__":
    key = jax.random.PRNGKey(0)
    kx, kw, kb, k2x, k2w, k2b = jax.random.split(key, 6)

    # --- Small test (toy Linear(32, 32), B=8): exercises the Din-pad path ---
    B, D_IN, D_OUT = 8, 32, 32
    x = jax.random.normal(kx, (B, 2, D_IN), dtype=jnp.float32)
    w = jax.random.normal(kw, (D_IN, D_OUT), dtype=jnp.float32) * (1.0 / D_IN ** 0.5)
    b = jax.random.normal(kb, (D_OUT,), dtype=jnp.float32) * 0.1

    for metric in ("SE", "L1", "EU"):
        out = _run(x, w, b, metric=metric)
        ref = twin_reference(x, w, b, metric=metric)
        assert out.shape == (B,)
        assert jnp.allclose(out, ref, rtol=2e-3, atol=2e-3), (metric, out, ref)

    # --- Larger check: B not a multiple of the tile -> cdiv grid + masked ---
    # --- tail, 2 "parallel" grid steps, aligned Din (no pad)              ---
    B2, D2_IN, D2_OUT = 1000, 128, 128
    x2 = jax.random.normal(k2x, (B2, 2, D2_IN), dtype=jnp.float32)
    w2 = jax.random.normal(k2w, (D2_IN, D2_OUT), dtype=jnp.float32) * (1.0 / D2_IN ** 0.5)
    b2 = jax.random.normal(k2b, (D2_OUT,), dtype=jnp.float32) * 0.1
    out2 = _run(x2, w2, b2, metric="SE")
    ref2 = twin_reference(x2, w2, b2, metric="SE")
    assert out2.shape == (B2,)
    assert jnp.allclose(out2, ref2, rtol=2e-3, atol=2e-3)

    print("KERNEL_OK")
</pallas_src>

<mosaic_0001>
module attributes {stable_mosaic.version = 11 : i64} {
  func.func @twin_kernel(%arg0: i32, %arg1: memref<8x256xf32, #tpu.memory_space<vmem>>, %arg2: memref<128x32xf32, #tpu.memory_space<vmem>>, %arg3: memref<8x1xf32, #tpu.memory_space<vmem>>) attributes {dimension_semantics = [#tpu.dimension_semantics<parallel>], iteration_bounds = array<i64: 1>, scalar_prefetch = 0 : i64, scratch_operands = 0 : i64, tpu.core_type = #tpu.core_type<tc>, window_params = [{transform_indices = @transform_0, window_bounds = array<i64: 8, 256>}, {pipeline_mode = #tpu.pipeline_mode<synchronous>, transform_indices = @transform_1, window_bounds = array<i64: 128, 32>}, {transform_indices = @transform_2, window_bounds = array<i64: 8, 1>}]} {
    %c0 = arith.constant 0 : index
    %c0_0 = arith.constant 0 : index
    %0 = vector.load %arg1[%c0, %c0_0] : memref<8x256xf32, #tpu.memory_space<vmem>>, vector<8x128xf32>
    %c0_1 = arith.constant 0 : index
    %c128 = arith.constant 128 : index
    %1 = vector.load %arg1[%c0_1, %c128] : memref<8x256xf32, #tpu.memory_space<vmem>>, vector<8x128xf32>
    %2 = arith.subf %0, %1 : vector<8x128xf32>
    %c0_2 = arith.constant 0 : index
    %c0_3 = arith.constant 0 : index
    %3 = vector.load %arg2[%c0_2, %c0_3] : memref<128x32xf32, #tpu.memory_space<vmem>>, vector<128x32xf32>
    %cst = arith.constant dense<0.000000e+00> : vector<8x32xf32>
    %4 = tpu.matmul %2, %3, %cst {dimension_numbers = #tpu.dot_dimension_numbers<[1], [0], [0], [1], [0, 0, 1, 1], [], []>} : vector<8x128xf32>, vector<128x32xf32>, vector<8x32xf32> -> vector<8x32xf32>
    %5 = arith.mulf %4, %4 : vector<8x32xf32>
    %cst_4 = arith.constant dense<0.000000e+00> : vector<8xf32>
    %6 = vector.multi_reduction <add>, %5, %cst_4 [1] : vector<8x32xf32> to vector<8xf32>
    %7 = vector.shape_cast %6 : vector<8xf32> to vector<8x1xf32>
    %cst_5 = arith.constant 5.000000e-01 : f32
    %8 = vector.broadcast %cst_5 : f32 to vector<8x1xf32>
    %9 = arith.mulf %7, %8 : vector<8x1xf32>
    %c0_6 = arith.constant 0 : index
    %c0_7 = arith.constant 0 : index
    %10 = vector.load %arg3[%c0_6, %c0_7] : memref<8x1xf32, #tpu.memory_space<vmem>>, vector<8x1xf32>
    tpu.vector_store %arg3[%c0_6, %c0_7], %9 {strides = array<i32>} : memref<8x1xf32, #tpu.memory_space<vmem>>, vector<8x1xf32>,
    return
  }
  func.func @transform_0(%arg0: i32) -> (i32, i32) {
    %c0_i32 = arith.constant 0 : i32
    %c0_i32_0 = arith.constant 0 : i32
    return %arg0, %c0_i32 : i32, i32
  }
  func.func @transform_1(%arg0: i32) -> (i32, i32) {
    %c0_i32 = arith.constant 0 : i32
    %c0_i32_0 = arith.constant 0 : i32
    %c0_i32_1 = arith.constant 0 : i32
    return %c0_i32, %c0_i32_0 : i32, i32
  }
  func.func @transform_2(%arg0: i32) -> (i32, i32) {
    %c0_i32 = arith.constant 0 : i32
    %c0_i32_0 = arith.constant 0 : i32
    return %arg0, %c0_i32 : i32, i32
  }
}

module attributes {stable_mosaic.version = 11 : i64} {
  func.func @twin_kernel(%arg0: i32, %arg1: memref<8x256xf32, #tpu.memory_space<vmem>>, %arg2: memref<128x32xf32, #tpu.memory_space<vmem>>, %arg3: memref<8x1xf32, #tpu.memory_space<vmem>>) attributes {dimension_semantics = [#tpu.dimension_semantics<parallel>], iteration_bounds = array<i64: 1>, scalar_prefetch = 0 : i64, scratch_operands = 0 : i64, tpu.core_type = #tpu.core_type<tc>, window_params = [{transform_indices = @transform_0, window_bounds = array<i64: 8, 256>}, {pipeline_mode = #tpu.pipeline_mode<synchronous>, transform_indices = @transform_1, window_bounds = array<i64: 128, 32>}, {transform_indices = @transform_2, window_bounds = array<i64: 8, 1>}]} {
    %c0 = arith.constant 0 : index
    %c0_0 = arith.constant 0 : index
    %0 = vector.load %arg1[%c0, %c0_0] : memref<8x256xf32, #tpu.memory_space<vmem>>, vector<8x128xf32>
    %c0_1 = arith.constant 0 : index
    %c128 = arith.constant 128 : index
    %1 = vector.load %arg1[%c0_1, %c128] : memref<8x256xf32, #tpu.memory_space<vmem>>, vector<8x128xf32>
    %2 = arith.subf %0, %1 : vector<8x128xf32>
    %c0_2 = arith.constant 0 : index
    %c0_3 = arith.constant 0 : index
    %3 = vector.load %arg2[%c0_2, %c0_3] : memref<128x32xf32, #tpu.memory_space<vmem>>, vector<128x32xf32>
    %cst = arith.constant dense<0.000000e+00> : vector<8x32xf32>
    %4 = tpu.matmul %2, %3, %cst {dimension_numbers = #tpu.dot_dimension_numbers<[1], [0], [0], [1], [0, 0, 1, 1], [], []>} : vector<8x128xf32>, vector<128x32xf32>, vector<8x32xf32> -> vector<8x32xf32>
    %5 = arith.mulf %4, %4 : vector<8x32xf32>
    %cst_4 = arith.constant dense<0.000000e+00> : vector<8xf32>
    %6 = vector.multi_reduction <add>, %5, %cst_4 [1] : vector<8x32xf32> to vector<8xf32>
    %7 = vector.shape_cast %6 : vector<8xf32> to vector<8x1xf32>
    %cst_5 = arith.constant 5.000000e-01 : f32
    %8 = vector.broadcast %cst_5 : f32 to vector<8x1xf32>
    %9 = arith.mulf %7, %8 : vector<8x1xf32>
    %c0_6 = arith.constant 0 : index
    %c0_7 = arith.constant 0 : index
    %10 = vector.load %arg3[%c0_6, %c0_7] : memref<8x1xf32, #tpu.memory_space<vmem>>, vector<8x1xf32>
    tpu.vector_store %arg3[%c0_6, %c0_7], %9 {strides = array<i32>} : memref<8x1xf32, #tpu.memory_space<vmem>>, vector<8x1xf32>,
    return
  }
  func.func @transform_0(%arg0: i32) -> (i32, i32) {
    %c0_i32 = arith.constant 0 : i32
    %c0_i32_0 = arith.constant 0 : i32
    return %arg0, %c0_i32 : i32, i32
  }
  func.func @transform_1(%arg0: i32) -> (i32, i32) {
    %c0_i32 = arith.constant 0 : i32
    %c0_i32_0 = arith.constant 0 : i32
    %c0_i32_1 = arith.constant 0 : i32
    return %c0_i32, %c0_i32_0 : i32, i32
  }
  func.func @transform_2(%arg0: i32) -> (i32, i32) {
    %c0_i32 = arith.constant 0 : i32
    %c0_i32_0 = arith.constant 0 : i32
    return %arg0, %c0_i32 : i32, i32
  }
}

</mosaic_0001>

<llo_original>
// kernel: tpu_custom_call.1
$region0: #{tpu_custom_call.1}
  #allocation0 [shape = 'u32[]', space=smem, size = 0x4, offset = 0x4, fixed_abs, tag = 'smem constant byte address 0x4 - core index']
  #allocation1 [shape = 'u32[144,128]{1,0:T(1,128)}', space=vmem, size = 0x12000, scoped, tag = 'internal scratch']
  %s0 = inlined_call_operand.vmem [shape: f32[8,256], index: 0, kind: input, shape index: {}]
  %s1 = inlined_call_operand.vmem [shape: f32[128,32], index: 1, kind: input, shape index: {}]
  %s2 = inlined_call_operand.vmem [shape: f32[8,1], index: 2, kind: output, shape index: {}]
  %s3 = sld [smem:[#allocation0]]
  $region18: #{tpu_custom_call.1} parent=0
    _
  %s5 = ssub.s32 1, %s3
  %s6 = scalar_select 0, %s5, %s3
  // Predicated region
  $region2: #{tpu_custom_call.1} parent=0 // pred_check
    _
  $region3: #{tpu_custom_call.1} parent=0 // pred_check_branch
    %8 = sbr.rel (0) target = $region5
  $region4: #{tpu_custom_call.1} parent=0 // pred_region
    _
  $region5: #{tpu_custom_call.1} parent=0 // pred_fallthru
    _
  // Predicated region
  $region6: #{tpu_custom_call.1} parent=0 // pred_check
    _
  $region7: #{tpu_custom_call.1} parent=0 // pred_check_branch
    %10 = sbr.rel (0) target = $region9
  $region8: #{tpu_custom_call.1} parent=0 // pred_region
    _
  $region9: #{tpu_custom_call.1} parent=0 // pred_fallthru
    _
  %v11 = vld [vmem:[%s0] sm:$0xff]
  %v12 = vld [vmem:[%s0 + $0x8] sm:$0xff]
  %v13 = vsub.f32 %v11, %v12
  %v14 = vld [vmem:[%s1] sm:$0xff]
  %v15 = vld [vmem:[%s1 + $0x8] sm:$0xff]
  %v16 = vld [vmem:[%s1 + $0x10] sm:$0xff]
  %v17 = vld [vmem:[%s1 + $0x18] sm:$0xff]
  %v18 = vld [vmem:[%s1 + $0x20] sm:$0xff]
  %v19 = vld [vmem:[%s1 + $0x28] sm:$0xff]
  %v20 = vld [vmem:[%s1 + $0x30] sm:$0xff]
  %v21 = vld [vmem:[%s1 + $0x38] sm:$0xff]
  %v22 = vld [vmem:[%s1 + $0x40] sm:$0xff]
  %v23 = vld [vmem:[%s1 + $0x48] sm:$0xff]
  %v24 = vld [vmem:[%s1 + $0x50] sm:$0xff]
  %v25 = vld [vmem:[%s1 + $0x58] sm:$0xff]
  %v26 = vld [vmem:[%s1 + $0x60] sm:$0xff]
  %v27 = vld [vmem:[%s1 + $0x68] sm:$0xff]
  %v28 = vld [vmem:[%s1 + $0x70] sm:$0xff]
  %v29 = vld [vmem:[%s1 + $0x78] sm:$0xff]
  %30 = vmatprep.subr.mxu0 0.0
  %31 = vmatpush1.msra.mxu0 %v29
  %32 = vmatprep.subr.mxu0 0.0
  %33 = vmatpush1.msra.mxu0 %v28
  %34 = vmatprep.subr.mxu0 0.0
  %35 = vmatpush1.msra.mxu0 %v27
  %36 = vmatprep.subr.mxu0 0.0
  %37 = vmatpush1.msra.mxu0 %v26
  %38 = vmatprep.subr.mxu0 0.0
  %39 = vmatpush1.msra.mxu0 %v25
  %40 = vmatprep.subr.mxu0 0.0
  %41 = vmatpush1.msra.mxu0 %v24
  %42 = vmatprep.subr.mxu0 0.0
  %43 = vmatpush1.msra.mxu0 %v23
  %44 = vmatprep.subr.mxu0 0.0
  %45 = vmatpush1.msra.mxu0 %v22
  %46 = vmatprep.subr.mxu0 0.0
  %47 = vmatpush1.msra.mxu0 %v21
  %48 = vmatprep.subr.mxu0 0.0
  %49 = vmatpush1.msra.mxu0 %v20
  %50 = vmatprep.subr.mxu0 0.0
  %51 = vmatpush1.msra.mxu0 %v19
  %52 = vmatprep.subr.mxu0 0.0
  %53 = vmatpush1.msra.mxu0 %v18
  %54 = vmatprep.subr.mxu0 0.0
  %55 = vmatpush1.msra.mxu0 %v17
  %56 = vmatprep.subr.mxu0 0.0
  %57 = vmatpush1.msra.mxu0 %v16
  %58 = vmatprep.subr.mxu0 0.0
  %59 = vmatpush1.msra.mxu0 %v15
  %60 = vmatprep.subr.mxu0 0.0
  %61 = vmatpush1.msra.mxu0 %v14
  %62 = vmatprep.subr.mxu0 0.0
  %63 = vmatpush2.msra.mxu0 0.0
  %64 = vmatprep.subr.mxu0 0.0
  %65 = vmatpush2.msra.mxu0 0.0
  %66 = vmatprep.subr.mxu0 0.0
  %67 = vmatpush2.msra.mxu0 0.0
  %68 = vmatprep.subr.mxu0 0.0
  %69 = vmatpush2.msra.mxu0 0.0
  %70 = vmatprep.subr.mxu0 0.0
  %71 = vmatpush2.msra.mxu0 0.0
  %72 = vmatprep.subr.mxu0 0.0
  %73 = vmatpush2.msra.mxu0 0.0
  %74 = vmatprep.subr.mxu0 0.0
  %75 = vmatpush2.msra.mxu0 0.0
  %76 = vmatprep.subr.mxu0 0.0
  %77 = vmatpush2.msra.mxu0 0.0
  %78 = vmatprep.subr.mxu0 0.0
  %79 = vmatpush2.msra.mxu0 0.0
  %80 = vmatprep.subr.mxu0 0.0
  %81 = vmatpush2.msra.mxu0 0.0
  %82 = vmatprep.subr.mxu0 0.0
  %83 = vmatpush2.msra.mxu0 0.0
  %84 = vmatprep.subr.mxu0 0.0
  %85 = vmatpush2.msra.mxu0 0.0
  %86 = vmatprep.subr.mxu0 0.0
  %87 = vmatpush2.msra.mxu0 0.0
  %88 = vmatprep.subr.mxu0 0.0
  %89 = vmatpush2.msra.mxu0 0.0
  %90 = vmatprep.subr.mxu0 0.0
  %91 = vmatpush2.msra.mxu0 0.0
  %92 = vmatprep.subr.mxu0 0.0
  %93 = vmatpush2.msra.mxu0 0.0
  %94 = vmatprep.mubr.f32.mxu0 0.0
  %95 = vmatmul.mubr.f32.gmra.mxu0 %v13
  %v96 = vpop.f32.mrf.mxu0
  %v97 = vadd.f32 0.0, %v96
  %v98 = vpop.f32.mrf.mxu0
  %99 = vdwg.mxu0
  %v100 = vmul.f32 %v97, %v97
  %vm101 = vcmask 261120
  %v102 = vsel %vm101, %v100, 0.0
  %103 = vadd.xlane.f32.xlu0 %v102
  %v104 = vpop.xlane.xlu0 %103
  %v105 = vmul.f32 %v104, 0.5
  %vm106 = vcmask 7168
  %107 = vst.msk [vmem:[%s2] sm:$0xff] %vm106, %v105
  // Predicated region
  $region10: #{tpu_custom_call.1} parent=0 // pred_check
    _
  $region11: #{tpu_custom_call.1} parent=0 // pred_check_branch
    %109 = sbr.rel (0) target = $region13
  $region12: #{tpu_custom_call.1} parent=0 // pred_region
    _
  $region13: #{tpu_custom_call.1} parent=0 // pred_fallthru
    _
  // Predicated region
  $region14: #{tpu_custom_call.1} parent=0 // pred_check
    _
  $region15: #{tpu_custom_call.1} parent=0 // pred_check_branch
    %111 = sbr.rel (0) target = $region17
  $region16: #{tpu_custom_call.1} parent=0 // pred_region
    _
  $region17: #{tpu_custom_call.1} parent=0 // pred_fallthru
    _

// kernel: tpu_custom_call.1
$region0: #{tpu_custom_call.1}
  #allocation0 [shape = 'u32[]', space=smem, size = 0x4, offset = 0x4, fixed_abs, tag = 'smem constant byte address 0x4 - core index']
  #allocation1 [shape = 'u32[144,128]{1,0:T(1,128)}', space=vmem, size = 0x12000, scoped, tag = 'internal scratch']
  %s0 = inlined_call_operand.vmem [shape: f32[8,256], index: 0, kind: input, shape index: {}]
  %s1 = inlined_call_operand.vmem [shape: f32[128,32], index: 1, kind: input, shape index: {}]
  %s2 = inlined_call_operand.vmem [shape: f32[8,1], index: 2, kind: output, shape index: {}]
  %s3 = sld [smem:[#allocation0]]
  $region18: #{tpu_custom_call.1} parent=0
    _
  %s5 = ssub.s32 1, %s3
  %s6 = scalar_select 0, %s5, %s3
  // Predicated region
  $region2: #{tpu_custom_call.1} parent=0 // pred_check
    _
  $region3: #{tpu_custom_call.1} parent=0 // pred_check_branch
    %8 = sbr.rel (0) target = $region5
  $region4: #{tpu_custom_call.1} parent=0 // pred_region
    _
  $region5: #{tpu_custom_call.1} parent=0 // pred_fallthru
    _
  // Predicated region
  $region6: #{tpu_custom_call.1} parent=0 // pred_check
    _
  $region7: #{tpu_custom_call.1} parent=0 // pred_check_branch
    %10 = sbr.rel (0) target = $region9
  $region8: #{tpu_custom_call.1} parent=0 // pred_region
    _
  $region9: #{tpu_custom_call.1} parent=0 // pred_fallthru
    _
  %v11 = vld [vmem:[%s0] sm:$0xff]
  %v12 = vld [vmem:[%s0 + $0x8] sm:$0xff]
  %v13 = vsub.f32 %v11, %v12
  %v14 = vld [vmem:[%s1] sm:$0xff]
  %v15 = vld [vmem:[%s1 + $0x8] sm:$0xff]
  %v16 = vld [vmem:[%s1 + $0x10] sm:$0xff]
  %v17 = vld [vmem:[%s1 + $0x18] sm:$0xff]
  %v18 = vld [vmem:[%s1 + $0x20] sm:$0xff]
  %v19 = vld [vmem:[%s1 + $0x28] sm:$0xff]
  %v20 = vld [vmem:[%s1 + $0x30] sm:$0xff]
  %v21 = vld [vmem:[%s1 + $0x38] sm:$0xff]
  %v22 = vld [vmem:[%s1 + $0x40] sm:$0xff]
  %v23 = vld [vmem:[%s1 + $0x48] sm:$0xff]
  %v24 = vld [vmem:[%s1 + $0x50] sm:$0xff]
  %v25 = vld [vmem:[%s1 + $0x58] sm:$0xff]
  %v26 = vld [vmem:[%s1 + $0x60] sm:$0xff]
  %v27 = vld [vmem:[%s1 + $0x68] sm:$0xff]
  %v28 = vld [vmem:[%s1 + $0x70] sm:$0xff]
  %v29 = vld [vmem:[%s1 + $0x78] sm:$0xff]
  %30 = vmatprep.subr.mxu0 0.0
  %31 = vmatpush1.msra.mxu0 %v29
  %32 = vmatprep.subr.mxu0 0.0
  %33 = vmatpush1.msra.mxu0 %v28
  %34 = vmatprep.subr.mxu0 0.0
  %35 = vmatpush1.msra.mxu0 %v27
  %36 = vmatprep.subr.mxu0 0.0
  %37 = vmatpush1.msra.mxu0 %v26
  %38 = vmatprep.subr.mxu0 0.0
  %39 = vmatpush1.msra.mxu0 %v25
  %40 = vmatprep.subr.mxu0 0.0
  %41 = vmatpush1.msra.mxu0 %v24
  %42 = vmatprep.subr.mxu0 0.0
  %43 = vmatpush1.msra.mxu0 %v23
  %44 = vmatprep.subr.mxu0 0.0
  %45 = vmatpush1.msra.mxu0 %v22
  %46 = vmatprep.subr.mxu0 0.0
  %47 = vmatpush1.msra.mxu0 %v21
  %48 = vmatprep.subr.mxu0 0.0
  %49 = vmatpush1.msra.mxu0 %v20
  %50 = vmatprep.subr.mxu0 0.0
  %51 = vmatpush1.msra.mxu0 %v19
  %52 = vmatprep.subr.mxu0 0.0
  %53 = vmatpush1.msra.mxu0 %v18
  %54 = vmatprep.subr.mxu0 0.0
  %55 = vmatpush1.msra.mxu0 %v17
  %56 = vmatprep.subr.mxu0 0.0
  %57 = vmatpush1.msra.mxu0 %v16
  %58 = vmatprep.subr.mxu0 0.0
  %59 = vmatpush1.msra.mxu0 %v15
  %60 = vmatprep.subr.mxu0 0.0
  %61 = vmatpush1.msra.mxu0 %v14
  %62 = vmatprep.subr.mxu0 0.0
  %63 = vmatpush2.msra.mxu0 0.0
  %64 = vmatprep.subr.mxu0 0.0
  %65 = vmatpush2.msra.mxu0 0.0
  %66 = vmatprep.subr.mxu0 0.0
  %67 = vmatpush2.msra.mxu0 0.0
  %68 = vmatprep.subr.mxu0 0.0
  %69 = vmatpush2.msra.mxu0 0.0
  %70 = vmatprep.subr.mxu0 0.0
  %71 = vmatpush2.msra.mxu0 0.0
  %72 = vmatprep.subr.mxu0 0.0
  %73 = vmatpush2.msra.mxu0 0.0
  %74 = vmatprep.subr.mxu0 0.0
  %75 = vmatpush2.msra.mxu0 0.0
  %76 = vmatprep.subr.mxu0 0.0
  %77 = vmatpush2.msra.mxu0 0.0
  %78 = vmatprep.subr.mxu0 0.0
  %79 = vmatpush2.msra.mxu0 0.0
  %80 = vmatprep.subr.mxu0 0.0
  %81 = vmatpush2.msra.mxu0 0.0
  %82 = vmatprep.subr.mxu0 0.0
  %83 = vmatpush2.msra.mxu0 0.0
  %84 = vmatprep.subr.mxu0 0.0
  %85 = vmatpush2.msra.mxu0 0.0
  %86 = vmatprep.subr.mxu0 0.0
  %87 = vmatpush2.msra.mxu0 0.0
  %88 = vmatprep.subr.mxu0 0.0
  %89 = vmatpush2.msra.mxu0 0.0
  %90 = vmatprep.subr.mxu0 0.0
  %91 = vmatpush2.msra.mxu0 0.0
  %92 = vmatprep.subr.mxu0 0.0
  %93 = vmatpush2.msra.mxu0 0.0
  %94 = vmatprep.mubr.f32.mxu0 0.0
  %95 = vmatmul.mubr.f32.gmra.mxu0 %v13
  %v96 = vpop.f32.mrf.mxu0
  %v97 = vadd.f32 0.0, %v96
  %v98 = vpop.f32.mrf.mxu0
  %99 = vdwg.mxu0
  %v100 = vmul.f32 %v97, %v97
  %vm101 = vcmask 261120
  %v102 = vsel %vm101, %v100, 0.0
  %103 = vadd.xlane.f32.xlu0 %v102
  %v104 = vpop.xlane.xlu0 %103
  %v105 = vmul.f32 %v104, 0.5
  %vm106 = vcmask 7168
  %107 = vst.msk [vmem:[%s2] sm:$0xff] %vm106, %v105
  // Predicated region
  $region10: #{tpu_custom_call.1} parent=0 // pred_check
    _
  $region11: #{tpu_custom_call.1} parent=0 // pred_check_branch
    %109 = sbr.rel (0) target = $region13
  $region12: #{tpu_custom_call.1} parent=0 // pred_region
    _
  $region13: #{tpu_custom_call.1} parent=0 // pred_fallthru
    _
  // Predicated region
  $region14: #{tpu_custom_call.1} parent=0 // pred_check
    _
  $region15: #{tpu_custom_call.1} parent=0 // pred_check_branch
    %111 = sbr.rel (0) target = $region17
  $region16: #{tpu_custom_call.1} parent=0 // pred_region
    _
  $region17: #{tpu_custom_call.1} parent=0 // pred_fallthru
    _

</llo_original>
